<compile_context>
chip_gen: v7x
topology: tpu7x:2x2x1
jax: 0.10.0
libtpu: 0.0.40
codegen_flags: <defaults>
</compile_context>

<pallas_src>
import jax
import jax.numpy as jnp
from jax.experimental import pallas as pl
from jax.experimental.pallas import tpu as pltpu

# ---------------- model hyper-parameters (small, consistent with __init__) ---
H_SIZE = 32          # h_size
Z_SIZE = 4           # z_size
Z_CLASSES = 4        # z_classes
MLP_SIZE = 32        # mlp_size
MLP_LAYERS = 2       # mlp_layers (kernel hard-codes 2 blocks)
ACTION_SIZE = 4      # action_size
ACTION_CLASSES = 8   # action_classes
BATCH = 8

Z_FLAT = Z_SIZE * Z_CLASSES
IN_DIM = H_SIZE + Z_FLAT                    # 48
OUT_DIM = ACTION_SIZE * ACTION_CLASSES      # 32
OUT_PAD = 128                               # lane-dense padded output width
LN_EPS = 1e-5                               # PyTorch nn.LayerNorm default


def _layernorm_silu(y, gamma, beta):
    """LayerNorm over last dim followed by SiLU, all in f32 (VPU/EUP)."""
    mu = jnp.mean(y, axis=-1, keepdims=True)
    var = jnp.mean((y - mu) * (y - mu), axis=-1, keepdims=True)
    yhat = (y - mu) * jax.lax.rsqrt(var + LN_EPS)
    yhat = yhat * gamma + beta
    return yhat * jax.nn.sigmoid(yhat)  # SiLU


def actor_kernel(h_ref, z_ref, wa_ref, ln_ref, wout_ref, out_ref):
    # Packed weight buffer wa_ref (bf16):
    #   rows [0:H_SIZE)            -> W_top   (fused input proj, h part)
    #   rows [H_SIZE:IN_DIM)       -> W_bot   (fused input proj, z part)
    #   rows [IN_DIM:IN_DIM+MLP)   -> wb2     (MLPBlock-2 linear)
    # ln_ref (f32, (4, MLP)): rows = [gamma1, beta1, gamma2, beta2]
    # wout_ref (bf16, (MLP, OUT_PAD)): output weight zero-padded to 128 lanes.
    h = h_ref[...].astype(jnp.bfloat16)                       # (B, H_SIZE)
    zf = z_ref[...].astype(jnp.bfloat16)                      # (B, Z_FLAT)
    ln = ln_ref[...]                                          # (4, MLP) f32

    # Fused (input Linear -> MLPBlock-1 Linear), split over h / z_flat rows.
    y = (jnp.dot(h, wa_ref[0:H_SIZE, :], preferred_element_type=jnp.float32)
         + jnp.dot(zf, wa_ref[H_SIZE:IN_DIM, :],
                   preferred_element_type=jnp.float32))       # (B, MLP) f32
    x = _layernorm_silu(y, ln[0:1, :], ln[1:2, :])

    # MLPBlock 2: Linear -> LayerNorm -> SiLU
    y = jnp.dot(x.astype(jnp.bfloat16), wa_ref[IN_DIM:IN_DIM + MLP_SIZE, :],
                preferred_element_type=jnp.float32)           # (B, MLP) f32
    x = _layernorm_silu(y, ln[2:3, :], ln[3:4, :])

    # Output projection into a lane-dense (B, 128) tile (unmasked store).
    out_ref[...] = jnp.dot(x.astype(jnp.bfloat16), wout_ref[...],
                           preferred_element_type=jnp.float32)


_VMEM = pl.BlockSpec(memory_space=pltpu.MemorySpace.VMEM)

_actor_call = pl.pallas_call(
    actor_kernel,
    out_shape=jax.ShapeDtypeStruct((BATCH, OUT_PAD), jnp.float32),
    in_specs=[_VMEM] * 5,
    out_specs=_VMEM,
)


def prepare_params(params):
    """One-time fold / pack / cast of the raw PyTorch-shaped parameters."""
    w1, wb1, g1, b1, wb2, g2, b2, wout = params
    # Fold the two bias-free Linears (done in f32, off the per-call path).
    w1_fused = jnp.dot(w1.astype(jnp.float32), wb1.astype(jnp.float32))  # (IN_DIM, MLP)
    wa = jnp.concatenate([w1_fused, wb2.astype(jnp.float32)],
                         axis=0).astype(jnp.bfloat16)                    # (IN_DIM+MLP, MLP)
    ln = jnp.concatenate([g1, b1, g2, b2], axis=0).astype(jnp.float32)   # (4, MLP)
    wout_pad = (jnp.zeros((MLP_SIZE, OUT_PAD), jnp.float32)
                .at[:, :OUT_DIM].set(wout.astype(jnp.float32))
                .astype(jnp.bfloat16))                                   # (MLP, 128)
    return wa, ln, wout_pad


@jax.jit
def actor_forward(h, z, wa, ln, wout_pad):
    """Returns action_logits of shape (B, ACTION_SIZE, ACTION_CLASSES)."""
    z_flat = z.reshape(z.shape[0], -1).astype(jnp.float32)   # view; no concat needed
    h = h.astype(jnp.float32)
    logits_pad = _actor_call(h, z_flat, wa, ln, wout_pad)    # (B, 128)
    logits = logits_pad[:, :OUT_DIM]
    # glue: unflatten(-1, (action_size, action_classes))
    action_logits = logits.reshape(h.shape[0], ACTION_SIZE, ACTION_CLASSES)
    # TODO(synk): OneHotCategoricalStraightThru (distribution object / one-hot
    # sampling with straight-through gradient) has no Pallas equivalent; the
    # kernel produces its defining logits.
    return action_logits


def init_params(key):
    """Deterministic init mirroring the PyTorch module's parameter shapes."""
    ks = jax.random.split(key, 4)

    def linear(k, fan_in, fan_out):
        bound = 1.0 / jnp.sqrt(fan_in)
        return jax.random.uniform(k, (fan_in, fan_out), jnp.float32,
                                  -bound, bound)

    w1 = linear(ks[0], IN_DIM, MLP_SIZE)          # critic[0]: Linear(no bias)
    wb1 = linear(ks[1], MLP_SIZE, MLP_SIZE)       # MLPBlock 1 linear
    g1 = jnp.ones((1, MLP_SIZE), jnp.float32)     # MLPBlock 1 LayerNorm gamma
    b1 = jnp.zeros((1, MLP_SIZE), jnp.float32)    # MLPBlock 1 LayerNorm beta
    wb2 = linear(ks[2], MLP_SIZE, MLP_SIZE)       # MLPBlock 2 linear
    g2 = jnp.ones((1, MLP_SIZE), jnp.float32)
    b2 = jnp.zeros((1, MLP_SIZE), jnp.float32)
    wout = linear(ks[3], MLP_SIZE, OUT_DIM)       # self.output: Linear(no bias)
    return (w1, wb1, g1, b1, wb2, g2, b2, wout)


def reference_forward(h, z, params):
    """Pure-JAX f32 reference (un-fused, un-packed) for correctness checking."""
    w1, wb1, g1, b1, wb2, g2, b2, wout = params
    x = jnp.concatenate([h, z.reshape(z.shape[0], -1)], axis=-1)
    x = x @ w1
    for w, g, b in ((wb1, g1, b1), (wb2, g2, b2)):
        y = x @ w
        mu = y.mean(-1, keepdims=True)
        var = ((y - mu) ** 2).mean(-1, keepdims=True)
        yh = (y - mu) / jnp.sqrt(var + LN_EPS) * g + b
        x = yh * jax.nn.sigmoid(yh)
    return (x @ wout).reshape(h.shape[0], ACTION_SIZE, ACTION_CLASSES)


if __name__ == "__main__":
    key = jax.random.PRNGKey(0)
    kp, kh, kz = jax.random.split(key, 3)
    params = init_params(kp)
    packed = prepare_params(params)

    h = jax.random.normal(kh, (BATCH, H_SIZE), jnp.float32)
    z = jax.random.normal(kz, (BATCH, Z_SIZE, Z_CLASSES), jnp.float32)

    out = actor_forward(h, z, *packed)
    jax.block_until_ready(out)

    ref = reference_forward(h, z, params)
    assert out.shape == (BATCH, ACTION_SIZE, ACTION_CLASSES)
    # bf16 MXU operands (f32 accumulate) => ~1e-3-level deviation vs pure-f32 ref.
    assert jnp.allclose(out, ref, atol=5e-2, rtol=5e-2), \
        f"max abs diff {jnp.max(jnp.abs(out - ref))}"

    print("KERNEL_OK")
</pallas_src>

<mosaic_0001>
module attributes {stable_mosaic.version = 11 : i64} {
  func.func @actor_kernel(%arg0: memref<8x32xf32, #tpu.memory_space<vmem>>, %arg1: memref<8x16xf32, #tpu.memory_space<vmem>>, %arg2: memref<80x32xbf16, #tpu.memory_space<vmem>>, %arg3: memref<4x32xf32, #tpu.memory_space<vmem>>, %arg4: memref<32x128xbf16, #tpu.memory_space<vmem>>, %arg5: memref<8x128xf32, #tpu.memory_space<vmem>>) attributes {dimension_semantics = [], scalar_prefetch = 0 : i64, scratch_operands = 0 : i64, tpu.core_type = #tpu.core_type<tc>} {
    %c0 = arith.constant 0 : index
    %c0_0 = arith.constant 0 : index
    %0 = vector.load %arg0[%c0, %c0_0] : memref<8x32xf32, #tpu.memory_space<vmem>>, vector<8x32xf32>
    %1 = arith.truncf %0 : vector<8x32xf32> to vector<8x32xbf16>
    %c0_1 = arith.constant 0 : index
    %c0_2 = arith.constant 0 : index
    %2 = vector.load %arg1[%c0_1, %c0_2] : memref<8x16xf32, #tpu.memory_space<vmem>>, vector<8x16xf32>
    %3 = arith.truncf %2 : vector<8x16xf32> to vector<8x16xbf16>
    %c0_3 = arith.constant 0 : index
    %c0_4 = arith.constant 0 : index
    %4 = vector.load %arg3[%c0_3, %c0_4] : memref<4x32xf32, #tpu.memory_space<vmem>>, vector<4x32xf32>
    %c0_5 = arith.constant 0 : index
    %c0_6 = arith.constant 0 : index
    %5 = vector.load %arg2[%c0_5, %c0_6] : memref<80x32xbf16, #tpu.memory_space<vmem>>, vector<32x32xbf16>
    %cst = arith.constant dense<0.000000e+00> : vector<8x32xf32>
    %6 = tpu.matmul %1, %5, %cst {dimension_numbers = #tpu.dot_dimension_numbers<[1], [0], [0], [1], [0, 0, 1, 1], [], []>} : vector<8x32xbf16>, vector<32x32xbf16>, vector<8x32xf32> -> vector<8x32xf32>
    %c32 = arith.constant 32 : index
    %c0_7 = arith.constant 0 : index
    %7 = vector.load %arg2[%c32, %c0_7] : memref<80x32xbf16, #tpu.memory_space<vmem>>, vector<16x32xbf16>
    %cst_8 = arith.constant dense<0.000000e+00> : vector<8x32xf32>
    %8 = tpu.matmul %3, %7, %cst_8 {dimension_numbers = #tpu.dot_dimension_numbers<[1], [0], [0], [1], [0, 0, 1, 1], [], []>} : vector<8x16xbf16>, vector<16x32xbf16>, vector<8x32xf32> -> vector<8x32xf32>
    %9 = arith.addf %6, %8 : vector<8x32xf32>
    %10 = vector.extract_strided_slice %4 {offsets = [0, 0], sizes = [1, 32], strides = [1, 1]} : vector<4x32xf32> to vector<1x32xf32>
    %11 = vector.extract_strided_slice %4 {offsets = [1, 0], sizes = [1, 32], strides = [1, 1]} : vector<4x32xf32> to vector<1x32xf32>
    %cst_9 = arith.constant dense<0.000000e+00> : vector<8xf32>
    %12 = vector.multi_reduction <add>, %9, %cst_9 [1] : vector<8x32xf32> to vector<8xf32>
    %13 = vector.shape_cast %12 : vector<8xf32> to vector<8x1xf32>
    %cst_10 = arith.constant 3.200000e+01 : f32
    %14 = vector.broadcast %cst_10 : f32 to vector<8x1xf32>
    %15 = arith.divf %13, %14 : vector<8x1xf32>
    %16 = vector.broadcast %15 : vector<8x1xf32> to vector<8x32xf32>
    %17 = arith.subf %9, %16 : vector<8x32xf32>
    %18 = vector.broadcast %15 : vector<8x1xf32> to vector<8x32xf32>
    %19 = arith.subf %9, %18 : vector<8x32xf32>
    %20 = arith.mulf %17, %19 : vector<8x32xf32>
    %cst_11 = arith.constant dense<0.000000e+00> : vector<8xf32>
    %21 = vector.multi_reduction <add>, %20, %cst_11 [1] : vector<8x32xf32> to vector<8xf32>
    %22 = vector.shape_cast %21 : vector<8xf32> to vector<8x1xf32>
    %cst_12 = arith.constant 3.200000e+01 : f32
    %23 = vector.broadcast %cst_12 : f32 to vector<8x1xf32>
    %24 = arith.divf %22, %23 : vector<8x1xf32>
    %25 = vector.broadcast %15 : vector<8x1xf32> to vector<8x32xf32>
    %26 = arith.subf %9, %25 : vector<8x32xf32>
    %cst_13 = arith.constant 9.99999974E-6 : f32
    %27 = vector.broadcast %cst_13 : f32 to vector<8x1xf32>
    %28 = arith.addf %24, %27 : vector<8x1xf32>
    %29 = math.rsqrt %28 : vector<8x1xf32>
    %30 = vector.broadcast %29 : vector<8x1xf32> to vector<8x32xf32>
    %31 = arith.mulf %26, %30 : vector<8x32xf32>
    %32 = vector.broadcast %10 : vector<1x32xf32> to vector<8x32xf32>
    %33 = arith.mulf %31, %32 : vector<8x32xf32>
    %34 = vector.broadcast %11 : vector<1x32xf32> to vector<8x32xf32>
    %35 = arith.addf %33, %34 : vector<8x32xf32>
    %36 = arith.negf %35 : vector<8x32xf32>
    %37 = math.exp %36 : vector<8x32xf32>
    %cst_14 = arith.constant 1.000000e+00 : f32
    %38 = vector.broadcast %cst_14 : f32 to vector<8x32xf32>
    %39 = arith.addf %38, %37 : vector<8x32xf32>
    %40 = arith.divf %38, %39 : vector<8x32xf32>
    %41 = arith.mulf %35, %40 : vector<8x32xf32>
    %42 = arith.truncf %41 : vector<8x32xf32> to vector<8x32xbf16>
    %c48 = arith.constant 48 : index
    %c0_15 = arith.constant 0 : index
    %43 = vector.load %arg2[%c48, %c0_15] : memref<80x32xbf16, #tpu.memory_space<vmem>>, vector<32x32xbf16>
    %cst_16 = arith.constant dense<0.000000e+00> : vector<8x32xf32>
    %44 = tpu.matmul %42, %43, %cst_16 {dimension_numbers = #tpu.dot_dimension_numbers<[1], [0], [0], [1], [0, 0, 1, 1], [], []>} : vector<8x32xbf16>, vector<32x32xbf16>, vector<8x32xf32> -> vector<8x32xf32>
    %45 = vector.extract_strided_slice %4 {offsets = [2, 0], sizes = [1, 32], strides = [1, 1]} : vector<4x32xf32> to vector<1x32xf32>
    %46 = vector.extract_strided_slice %4 {offsets = [3, 0], sizes = [1, 32], strides = [1, 1]} : vector<4x32xf32> to vector<1x32xf32>
    %cst_17 = arith.constant dense<0.000000e+00> : vector<8xf32>
    %47 = vector.multi_reduction <add>, %44, %cst_17 [1] : vector<8x32xf32> to vector<8xf32>
    %48 = vector.shape_cast %47 : vector<8xf32> to vector<8x1xf32>
    %cst_18 = arith.constant 3.200000e+01 : f32
    %49 = vector.broadcast %cst_18 : f32 to vector<8x1xf32>
    %50 = arith.divf %48, %49 : vector<8x1xf32>
    %51 = vector.broadcast %50 : vector<8x1xf32> to vector<8x32xf32>
    %52 = arith.subf %44, %51 : vector<8x32xf32>
    %53 = vector.broadcast %50 : vector<8x1xf32> to vector<8x32xf32>
    %54 = arith.subf %44, %53 : vector<8x32xf32>
    %55 = arith.mulf %52, %54 : vector<8x32xf32>
    %cst_19 = arith.constant dense<0.000000e+00> : vector<8xf32>
    %56 = vector.multi_reduction <add>, %55, %cst_19 [1] : vector<8x32xf32> to vector<8xf32>
    %57 = vector.shape_cast %56 : vector<8xf32> to vector<8x1xf32>
    %cst_20 = arith.constant 3.200000e+01 : f32
    %58 = vector.broadcast %cst_20 : f32 to vector<8x1xf32>
    %59 = arith.divf %57, %58 : vector<8x1xf32>
    %60 = vector.broadcast %50 : vector<8x1xf32> to vector<8x32xf32>
    %61 = arith.subf %44, %60 : vector<8x32xf32>
    %cst_21 = arith.constant 9.99999974E-6 : f32
    %62 = vector.broadcast %cst_21 : f32 to vector<8x1xf32>
    %63 = arith.addf %59, %62 : vector<8x1xf32>
    %64 = math.rsqrt %63 : vector<8x1xf32>
    %65 = vector.broadcast %64 : vector<8x1xf32> to vector<8x32xf32>
    %66 = arith.mulf %61, %65 : vector<8x32xf32>
    %67 = vector.broadcast %45 : vector<1x32xf32> to vector<8x32xf32>
    %68 = arith.mulf %66, %67 : vector<8x32xf32>
    %69 = vector.broadcast %46 : vector<1x32xf32> to vector<8x32xf32>
    %70 = arith.addf %68, %69 : vector<8x32xf32>
    %71 = arith.negf %70 : vector<8x32xf32>
    %72 = math.exp %71 : vector<8x32xf32>
    %cst_22 = arith.constant 1.000000e+00 : f32
    %73 = vector.broadcast %cst_22 : f32 to vector<8x32xf32>
    %74 = arith.addf %73, %72 : vector<8x32xf32>
    %75 = arith.divf %73, %74 : vector<8x32xf32>
    %76 = arith.mulf %70, %75 : vector<8x32xf32>
    %77 = arith.truncf %76 : vector<8x32xf32> to vector<8x32xbf16>
    %c0_23 = arith.constant 0 : index
    %c0_24 = arith.constant 0 : index
    %78 = vector.load %arg4[%c0_23, %c0_24] : memref<32x128xbf16, #tpu.memory_space<vmem>>, vector<32x128xbf16>
    %cst_25 = arith.constant dense<0.000000e+00> : vector<8x128xf32>
    %79 = tpu.matmul %77, %78, %cst_25 {dimension_numbers = #tpu.dot_dimension_numbers<[1], [0], [0], [1], [0, 0, 1, 1], [], []>} : vector<8x32xbf16>, vector<32x128xbf16>, vector<8x128xf32> -> vector<8x128xf32>
    %c0_26 = arith.constant 0 : index
    %c0_27 = arith.constant 0 : index
    %80 = vector.load %arg5[%c0_26, %c0_27] : memref<8x128xf32, #tpu.memory_space<vmem>>, vector<8x128xf32>
    tpu.vector_store %arg5[%c0_26, %c0_27], %79 {strides = array<i32>} : memref<8x128xf32, #tpu.memory_space<vmem>>, vector<8x128xf32>,
    return
  }
}

</mosaic_0001>

<llo_original>
// kernel: actor_forward.1
$region0: #{actor_forward.1}
  #allocation0 [shape = 'u32[]', space=smem, size = 0x4, offset = 0x4, fixed_abs, tag = 'smem constant byte address 0x4 - core index']
  #allocation1 [shape = 'u32[144,128]{1,0:T(1,128)}', space=vmem, size = 0x12000, scoped, tag = 'internal scratch']
  %s0 = inlined_call_operand.vmem [shape: f32[8,32], index: 0, kind: input, shape index: {}]
  %s1 = inlined_call_operand.vmem [shape: f32[8,16], index: 1, kind: input, shape index: {}]
  %s2 = inlined_call_operand.vmem [shape: bf16[80,32], index: 2, kind: input, shape index: {}]
  %s3 = inlined_call_operand.vmem [shape: f32[4,32], index: 3, kind: input, shape index: {}]
  %s4 = inlined_call_operand.vmem [shape: bf16[32,128], index: 4, kind: input, shape index: {}]
  %s5 = inlined_call_operand.vmem [shape: f32[8,128], index: 5, kind: output, shape index: {}]
  %s6 = sld [smem:[#allocation0]]
  $region30: #{actor_forward.1} parent=0
    _
  %s8 = ssub.s32 1, %s6
  %s9 = scalar_select 0, %s8, %s6
  // Predicated region
  $region2: #{actor_forward.1} parent=0 // pred_check
    _
  $region3: #{actor_forward.1} parent=0 // pred_check_branch
    %11 = sbr.rel (0) target = $region5
  $region4: #{actor_forward.1} parent=0 // pred_region
    _
  $region5: #{actor_forward.1} parent=0 // pred_fallthru
    _
  // Predicated region
  $region6: #{actor_forward.1} parent=0 // pred_check
    _
  $region7: #{actor_forward.1} parent=0 // pred_check_branch
    %13 = sbr.rel (0) target = $region9
  $region8: #{actor_forward.1} parent=0 // pred_region
    _
  $region9: #{actor_forward.1} parent=0 // pred_fallthru
    _
  // Predicated region
  $region10: #{actor_forward.1} parent=0 // pred_check
    _
  $region11: #{actor_forward.1} parent=0 // pred_check_branch
    %15 = sbr.rel (0) target = $region13
  $region12: #{actor_forward.1} parent=0 // pred_region
    _
  $region13: #{actor_forward.1} parent=0 // pred_fallthru
    _
  // Predicated region
  $region14: #{actor_forward.1} parent=0 // pred_check
    _
  $region15: #{actor_forward.1} parent=0 // pred_check_branch
    %17 = sbr.rel (0) target = $region17
  $region16: #{actor_forward.1} parent=0 // pred_region
    _
  $region17: #{actor_forward.1} parent=0 // pred_fallthru
    _
  // Predicated region
  $region18: #{actor_forward.1} parent=0 // pred_check
    _
  $region19: #{actor_forward.1} parent=0 // pred_check_branch
    %19 = sbr.rel (0) target = $region21
  $region20: #{actor_forward.1} parent=0 // pred_region
    _
  $region21: #{actor_forward.1} parent=0 // pred_fallthru
    _
  %v21 = vld [vmem:[%s0] sm:$0xff]
  %v22 = vpack.c.bf16 %v21, %v21
  %v23 = vld [vmem:[%s1] sm:$0xff]
  %v24 = vpack.c.bf16 %v23, %v23
  %v25 = vld [vmem:[%s3] sm:$0xf]
  %v26 = vld [vmem:[%s2] sm:$0xf]
  %v27 = vld [vmem:[%s2 + $0x4] sm:$0xf]
  %v28 = vld [vmem:[%s2 + $0x8] sm:$0xf]
  %v29 = vld [vmem:[%s2 + $0xc] sm:$0xf]
  %v30 = vld [vmem:[%s2 + $0x10] sm:$0xf]
  %v31 = vld [vmem:[%s2 + $0x14] sm:$0xf]
  %v34 = vunpack.c.l.b16 %v30
  %v35 = vunpack.c.l.b16 %v31
  %v36 = vpack.c.b16 %v35, %v34
  %vm38 = vcmask 130048
  %v40 = vsel %vm38, %v24, 0
  %42 = vmatprep.subr.bf16.mxu0 0
  %43 = vmatpush1.bf16.msra.mxu0 %v36
  %44 = vmatprep.subr.bf16.mxu0 0
  %45 = vmatpush1.bf16.msra.mxu0 0
  %46 = vmatprep.subr.bf16.mxu0 0
  %47 = vmatpush1.bf16.msra.mxu0 0
  %48 = vmatprep.subr.bf16.mxu0 0
  %49 = vmatpush1.bf16.msra.mxu0 0
  %50 = vmatprep.subr.bf16.mxu0 0
  %51 = vmatpush1.bf16.msra.mxu0 0
  %52 = vmatprep.subr.bf16.mxu0 0
  %53 = vmatpush1.bf16.msra.mxu0 0
  %54 = vmatprep.subr.bf16.mxu0 0
  %55 = vmatpush1.bf16.msra.mxu0 0
  %56 = vmatprep.subr.bf16.mxu0 0
  %57 = vmatpush1.bf16.msra.mxu0 0
  %58 = vmatprep.subr.bf16.mxu0 0
  %59 = vmatpush1.bf16.msra.mxu0 0
  %60 = vmatprep.subr.bf16.mxu0 0
  %61 = vmatpush1.bf16.msra.mxu0 0
  %62 = vmatprep.subr.bf16.mxu0 0
  %63 = vmatpush1.bf16.msra.mxu0 0
  %64 = vmatprep.subr.bf16.mxu0 0
  %65 = vmatpush1.bf16.msra.mxu0 0
  %66 = vmatprep.subr.bf16.mxu0 0
  %67 = vmatpush1.bf16.msra.mxu0 0
  %68 = vmatprep.subr.bf16.mxu0 0
  %69 = vmatpush1.bf16.msra.mxu0 0
  %70 = vmatprep.subr.bf16.mxu0 0
  %71 = vmatpush1.bf16.msra.mxu0 0
  %72 = vmatprep.subr.bf16.mxu0 0
  %73 = vmatpush1.bf16.msra.mxu0 0
  %74 = vmatprep.mubr.bf16.mxu0 0
  %75 = vmatmul.mubr.bf16.gmra.mrb[0].mxu0 %v40
  %v76 = vpop.f32.mrb[0].mxu0
  %v77 = vadd.f32 0.0, %v76
  %v78 = vpop.f32.mrb[0].mxu0
  %v79 = vpop.f32.mrb[0].mxu0
  %v80 = vpop.f32.mrb[0].mxu0
  %81 = vdwg.mxu0
  %v86 = vunpack.c.l.b16 %v26
  %v87 = vunpack.c.l.b16 %v27
  %v88 = vunpack.c.l.b16 %v28
  %v89 = vunpack.c.l.b16 %v29
  %v90 = vpack.c.b16 %v87, %v86
  %v91 = vpack.c.b16 %v89, %v88
  %vm94 = vcmask 261120
  %v96 = vsel %vm94, %v22, 0
  %98 = vmatprep.subr.bf16.mxu0 0
  %99 = vmatpush1.bf16.msra.mxu0 %v90
  %100 = vmatprep.subr.bf16.mxu0 0
  %101 = vmatpush1.bf16.msra.mxu0 %v91
  %102 = vmatprep.subr.bf16.mxu0 0
  %103 = vmatpush1.bf16.msra.mxu0 0
  %104 = vmatprep.subr.bf16.mxu0 0
  %105 = vmatpush1.bf16.msra.mxu0 0
  %106 = vmatprep.subr.bf16.mxu0 0
  %107 = vmatpush1.bf16.msra.mxu0 0
  %108 = vmatprep.subr.bf16.mxu0 0
  %109 = vmatpush1.bf16.msra.mxu0 0
  %110 = vmatprep.subr.bf16.mxu0 0
  %111 = vmatpush1.bf16.msra.mxu0 0
  %112 = vmatprep.subr.bf16.mxu0 0
  %113 = vmatpush1.bf16.msra.mxu0 0
  %114 = vmatprep.subr.bf16.mxu0 0
  %115 = vmatpush1.bf16.msra.mxu0 0
  %116 = vmatprep.subr.bf16.mxu0 0
  %117 = vmatpush1.bf16.msra.mxu0 0
  %118 = vmatprep.subr.bf16.mxu0 0
  %119 = vmatpush1.bf16.msra.mxu0 0
  %120 = vmatprep.subr.bf16.mxu0 0
  %121 = vmatpush1.bf16.msra.mxu0 0
  %122 = vmatprep.subr.bf16.mxu0 0
  %123 = vmatpush1.bf16.msra.mxu0 0
  %124 = vmatprep.subr.bf16.mxu0 0
  %125 = vmatpush1.bf16.msra.mxu0 0
  %126 = vmatprep.subr.bf16.mxu0 0
  %127 = vmatpush1.bf16.msra.mxu0 0
  %128 = vmatprep.subr.bf16.mxu0 0
  %129 = vmatpush1.bf16.msra.mxu0 0
  %130 = vmatprep.mubr.bf16.mxu0 0
  %131 = vmatmul.mubr.bf16.gmra.mrb[0].mxu0 %v96
  %v132 = vpop.f32.mrb[0].mxu0
  %v133 = vadd.f32 %v77, %v132
  %v134 = vpop.f32.mrb[0].mxu0
  %v135 = vpop.f32.mrb[0].mxu0
  %v136 = vpop.f32.mrb[0].mxu0
  %137 = vdwg.mxu0
  %v138 = vsel %vm94, %v133, 0.0
  %139 = vadd.xlane.f32.xlu0 %v138
  %v140 = vpop.xlane.xlu0 %139
  %v141 = vrcp.pop 32.0
  %v142 = vmul.f32 %v140, %v141
  %v143 = vsub.f32 %v133, %v142
  %v144 = vmul.f32 %v143, %v143
  %v145 = vsel %vm94, %v144, 0.0
  %146 = vadd.xlane.f32.xlu0 %v145
  %v147 = vpop.xlane.xlu0 %146
  %v148 = vmul.f32 %v147, %v141
  %v149 = vadd.f32 %v148, 1e-05
  %v150 = vrsqrt.pop %v149
  %v151 = vmul.f32 %v143, %v150
  %v152 = vlaneseq
  %v153 = vshrl.u32 %v152, 7
  %v154 = vsub.s32 0, %v153
  %v155 = vrot.slane %v25, %v154
  %v156 = vmul.f32 %v151, %v155
  %v157 = vlaneseq
  %v158 = vshrl.u32 %v157, 7
  %v159 = vsub.s32 1, %v158
  %v160 = vrot.slane %v25, %v159
  %v161 = vadd.f32 %v156, %v160
  %v162 = vxor.u32 %v161, 2147483648
  %v163 = vmul.f32 %v162, 1.442695
  %v164 = vpow.pop %v163
  %v165 = vadd.f32 %v164, 1.0
  %v166 = vrcp.pop %v165
  %v167 = vmul.f32 1.0, %v166
  %v168 = vmul.f32 %v161, %v167
  %v169 = vpack.c.bf16 %v168, %v168
  %v170 = vld [vmem:[%s2 + $0x18] sm:$0xf]
  %v171 = vld [vmem:[%s2 + $0x1c] sm:$0xf]
  %v172 = vld [vmem:[%s2 + $0x20] sm:$0xf]
  %v173 = vld [vmem:[%s2 + $0x24] sm:$0xf]
  %v178 = vunpack.c.l.b16 %v170
  %v179 = vunpack.c.l.b16 %v171
  %v180 = vunpack.c.l.b16 %v172
  %v181 = vunpack.c.l.b16 %v173
  %v182 = vpack.c.b16 %v179, %v178
  %v183 = vpack.c.b16 %v181, %v180
  %v187 = vsel %vm94, %v169, 0
  %189 = vmatprep.subr.bf16.mxu0 0
  %190 = vmatpush1.bf16.msra.mxu0 %v182
  %191 = vmatprep.subr.bf16.mxu0 0
  %192 = vmatpush1.bf16.msra.mxu0 %v183
  %193 = vmatprep.subr.bf16.mxu0 0
  %194 = vmatpush1.bf16.msra.mxu0 0
  %195 = vmatprep.subr.bf16.mxu0 0
  %196 = vmatpush1.bf16.msra.mxu0 0
  %197 = vmatprep.subr.bf16.mxu0 0
  %198 = vmatpush1.bf16.msra.mxu0 0
  %199 = vmatprep.subr.bf16.mxu0 0
  %200 = vmatpush1.bf16.msra.mxu0 0
  %201 = vmatprep.subr.bf16.mxu0 0
  %202 = vmatpush1.bf16.msra.mxu0 0
  %203 = vmatprep.subr.bf16.mxu0 0
  %204 = vmatpush1.bf16.msra.mxu0 0
  %205 = vmatprep.subr.bf16.mxu0 0
  %206 = vmatpush1.bf16.msra.mxu0 0
  %207 = vmatprep.subr.bf16.mxu0 0
  %208 = vmatpush1.bf16.msra.mxu0 0
  %209 = vmatprep.subr.bf16.mxu0 0
  %210 = vmatpush1.bf16.msra.mxu0 0
  %211 = vmatprep.subr.bf16.mxu0 0
  %212 = vmatpush1.bf16.msra.mxu0 0
  %213 = vmatprep.subr.bf16.mxu0 0
  %214 = vmatpush1.bf16.msra.mxu0 0
  %215 = vmatprep.subr.bf16.mxu0 0
  %216 = vmatpush1.bf16.msra.mxu0 0
  %217 = vmatprep.subr.bf16.mxu0 0
  %218 = vmatpush1.bf16.msra.mxu0 0
  %219 = vmatprep.subr.bf16.mxu0 0
  %220 = vmatpush1.bf16.msra.mxu0 0
  %221 = vmatprep.mubr.bf16.mxu0 0
  %222 = vmatmul.mubr.bf16.gmra.mrb[0].mxu0 %v187
  %v223 = vpop.f32.mrb[0].mxu0
  %v224 = vadd.f32 0.0, %v223
  %v225 = vpop.f32.mrb[0].mxu0
  %v226 = vpop.f32.mrb[0].mxu0
  %v227 = vpop.f32.mrb[0].mxu0
  %228 = vdwg.mxu0
  %v229 = vsel %vm94, %v224, 0.0
  %230 = vadd.xlane.f32.xlu0 %v229
  %v231 = vpop.xlane.xlu0 %230
  %v232 = vmul.f32 %v231, %v141
  %v233 = vsub.f32 %v224, %v232
  %v234 = vmul.f32 %v233, %v233
  %v235 = vsel %vm94, %v234, 0.0
  %236 = vadd.xlane.f32.xlu0 %v235
  %v237 = vpop.xlane.xlu0 %236
  %v238 = vmul.f32 %v237, %v141
  %v239 = vadd.f32 %v238, 1e-05
  %v240 = vrsqrt.pop %v239
  %v241 = vmul.f32 %v233, %v240
  %v242 = vlaneseq
  %v243 = vshrl.u32 %v242, 7
  %v244 = vsub.s32 2, %v243
  %v245 = vrot.slane %v25, %v244
  %v246 = vmul.f32 %v241, %v245
  %v247 = vlaneseq
  %v248 = vshrl.u32 %v247, 7
  %v249 = vsub.s32 3, %v248
  %v250 = vrot.slane %v25, %v249
  %v251 = vadd.f32 %v246, %v250
  %v252 = vxor.u32 %v251, 2147483648
  %v253 = vmul.f32 %v252, 1.442695
  %v254 = vpow.pop %v253
  %v255 = vadd.f32 %v254, 1.0
  %v256 = vrcp.pop %v255
  %v257 = vmul.f32 1.0, %v256
  %v258 = vmul.f32 %v251, %v257
  %v259 = vpack.c.bf16 %v258, %v258
  %v260 = vld [vmem:[%s4] sm:$0xf]
  %v261 = vld [vmem:[%s4 + $0x4] sm:$0xf]
  %v262 = vld [vmem:[%s4 + $0x8] sm:$0xf]
  %v263 = vld [vmem:[%s4 + $0xc] sm:$0xf]
  %v268 = vunpack.c.l.b16 %v260
  %v269 = vunpack.c.l.b16 %v261
  %v270 = vunpack.c.l.b16 %v262
  %v271 = vunpack.c.l.b16 %v263
  %v272 = vpack.c.b16 %v269, %v268
  %v273 = vpack.c.b16 %v271, %v270
  %v277 = vsel %vm94, %v259, 0
  %279 = vmatprep.subr.bf16.mxu0 0
  %280 = vmatpush1.bf16.msra.mxu0 %v272
  %281 = vmatprep.subr.bf16.mxu0 0
  %282 = vmatpush1.bf16.msra.mxu0 %v273
  %283 = vmatprep.subr.bf16.mxu0 0
  %284 = vmatpush1.bf16.msra.mxu0 0
  %285 = vmatprep.subr.bf16.mxu0 0
  %286 = vmatpush1.bf16.msra.mxu0 0
  %287 = vmatprep.subr.bf16.mxu0 0
  %288 = vmatpush1.bf16.msra.mxu0 0
  %289 = vmatprep.subr.bf16.mxu0 0
  %290 = vmatpush1.bf16.msra.mxu0 0
  %291 = vmatprep.subr.bf16.mxu0 0
  %292 = vmatpush1.bf16.msra.mxu0 0
  %293 = vmatprep.subr.bf16.mxu0 0
  %294 = vmatpush1.bf16.msra.mxu0 0
  %295 = vmatprep.subr.bf16.mxu0 0
  %296 = vmatpush1.bf16.msra.mxu0 0
  %297 = vmatprep.subr.bf16.mxu0 0
  %298 = vmatpush1.bf16.msra.mxu0 0
  %299 = vmatprep.subr.bf16.mxu0 0
  %300 = vmatpush1.bf16.msra.mxu0 0
  %301 = vmatprep.subr.bf16.mxu0 0
  %302 = vmatpush1.bf16.msra.mxu0 0
  %303 = vmatprep.subr.bf16.mxu0 0
  %304 = vmatpush1.bf16.msra.mxu0 0
  %305 = vmatprep.subr.bf16.mxu0 0
  %306 = vmatpush1.bf16.msra.mxu0 0
  %307 = vmatprep.subr.bf16.mxu0 0
  %308 = vmatpush1.bf16.msra.mxu0 0
  %309 = vmatprep.subr.bf16.mxu0 0
  %310 = vmatpush1.bf16.msra.mxu0 0
  %311 = vmatprep.mubr.bf16.mxu0 0
  %312 = vmatmul.mubr.bf16.gmra.mrb[0].mxu0 %v277
  %v313 = vpop.f32.mrb[0].mxu0
  %v314 = vadd.f32 0.0, %v313
  %v315 = vpop.f32.mrb[0].mxu0
  %v316 = vpop.f32.mrb[0].mxu0
  %v317 = vpop.f32.mrb[0].mxu0
  %318 = vdwg.mxu0
  %319 = vst [vmem:[%s5] sm:$0xff] %v314
  // Predicated region
  $region22: #{actor_forward.1} parent=0 // pred_check
    _
  $region23: #{actor_forward.1} parent=0 // pred_check_branch
    %321 = sbr.rel (0) target = $region25
  $region24: #{actor_forward.1} parent=0 // pred_region
    _
  $region25: #{actor_forward.1} parent=0 // pred_fallthru
    _
  // Predicated region
  $region26: #{actor_forward.1} parent=0 // pred_check
    _
  $region27: #{actor_forward.1} parent=0 // pred_check_branch
    %323 = sbr.rel (0) target = $region29
  $region28: #{actor_forward.1} parent=0 // pred_region
    _
  $region29: #{actor_forward.1} parent=0 // pred_fallthru
    _

</llo_original>
